<compile_context>
chip_gen: v7x
topology: tpu7x:2x2x1
jax: 0.10.0
libtpu: 0.0.40
codegen_flags: <defaults>
</compile_context>

<pallas_src>
import functools

import jax
import jax.numpy as jnp
import numpy as np
from jax import lax
from jax.experimental import pallas as pl
from jax.experimental.pallas import tpu as pltpu

N_GROUPS = 32
EPS = 1e-6  # MaskNormalize passes eps=1e-06 to MaskGroupNorm


# --------------------------------------------------------------------------
# in-kernel helpers
# --------------------------------------------------------------------------
def _group_indicators(cg, tg):
    """Factored group-indicator matrices, generated in VMEM (no HBM traffic).

    P  (tg, cb): P[g, c]  = 1 iff channel c belongs to group g   (reduce)
    Pt (cb, tg): Pt[c, g] = 1 iff channel c belongs to group g   (broadcast)
    """
    cb = tg * cg
    g_row = lax.broadcasted_iota(jnp.int32, (tg, cb), 0)
    c_col = lax.broadcasted_iota(jnp.int32, (tg, cb), 1) // cg
    P = (g_row == c_col).astype(jnp.float32)
    c_row = lax.broadcasted_iota(jnp.int32, (cb, tg), 0) // cg
    g_col = lax.broadcasted_iota(jnp.int32, (cb, tg), 1)
    Pt = (c_row == g_col).astype(jnp.float32)
    return P, Pt


def _mask_group_norm_kernel(x_ref, mk_ref, w_ref, b_ref, o_ref, *, cg, tg, hw):
    # x_ref:  (1, cb, hw)   channel block (whole groups, full spatial)
    # mk_ref: (1, 1,  hw)   0/1 mask (1 = "valid" region), f32
    # w_ref / b_ref: (cb, 1) per-channel affine, f32
    x = x_ref[0].astype(jnp.float32)            # (cb, hw)
    mk = mk_ref[0]                              # (1, hw)
    w = w_ref[...]                              # (cb, 1)
    b = b_ref[...]                              # (cb, 1)

    nD = float(cg * hw)                         # elements per group
    # masked-out count per group (channel independent): m = cg * sum(1-mask)
    m = float(cg) * (float(hw) - jnp.sum(mk, axis=-1, keepdims=True))   # (1,1)

    # ---- single elementwise pass: per-channel partial sums --------------
    x2 = x * x
    xm = x * mk
    stats = jnp.concatenate(
        [jnp.sum(x, axis=-1, keepdims=True),        # S   : sum(x)
         jnp.sum(xm, axis=-1, keepdims=True),       # S1  : sum(x*mask)
         jnp.sum(x2, axis=-1, keepdims=True),       # S2  : sum(x^2)
         jnp.sum(x2 * mk, axis=-1, keepdims=True)], # S2m : sum(mask*x^2)
        axis=-1)                                    # (cb, 4)

    if cg > 1:
        P, Pt = _group_indicators(cg, tg)
        reduce_g = lambda v: jnp.dot(P, v, preferred_element_type=jnp.float32)
        bcast_g = lambda v: jnp.dot(Pt, v, preferred_element_type=jnp.float32)
    else:  # channels == groups: reduce / broadcast are identities
        reduce_g = bcast_g = lambda v: v

    gstats = reduce_g(stats)                    # (tg, 4) per-group sums
    S, S1, S2, S2m = (gstats[:, 0:1], gstats[:, 1:2],
                      gstats[:, 2:3], gstats[:, 3:4])

    # ---- per-group statistics (all on tiny (tg,1) vectors) ---------------
    mean_f = S / nD                                         # full-branch mean
    ss_f = S2 - S * mean_f                                  # Σ(x-mean_f)^2
    rstd_f = lax.rsqrt(ss_f / (nD - 1.0) + EPS)

    mean_r = S1 / (nD - m + EPS)                            # masked-branch mean
    mu_ff = (S1 + m * mean_r) / nD                          # mean of x_fulfill
    ssm = S2m - 2.0 * mu_ff * S1 + mu_ff * mu_ff * (nD - m) # Σ mk*(x-mu_ff)^2
    ssb = ssm + m * (mean_r - mu_ff) ** 2                   # Σ(x_fulfill-mu_ff)^2
    rstd_m = lax.rsqrt(ssb / (nD - m - 1.0 + EPS) + EPS)

    gvals = jnp.concatenate([mean_f, rstd_f, mean_r, rstd_m], axis=-1)  # (tg,4)
    cvals = bcast_g(gvals)                                              # (cb,4)

    # ---- affine folded into per-channel scale / shift --------------------
    scale_f = w * cvals[:, 1:2]
    shift_f = b - scale_f * cvals[:, 0:1]
    scale_m = w * cvals[:, 3:4]
    shift_m = b - scale_m * cvals[:, 2:3]

    sel = mk > 0.0                                          # (1, hw)
    scale = jnp.where(sel, scale_m, scale_f)                # (cb, hw)
    shift = jnp.where(sel, shift_m, shift_f)                # (cb, hw)
    o_ref[0] = (x * scale + shift).astype(o_ref.dtype)


def _group_norm_kernel(x_ref, w_ref, b_ref, o_ref, *, cg, tg, hw):
    """skip_mask=True specialization: plain unbiased group norm, no mask."""
    x = x_ref[0].astype(jnp.float32)            # (cb, hw)
    w = w_ref[...]
    b = b_ref[...]
    nD = float(cg * hw)

    stats = jnp.concatenate(
        [jnp.sum(x, axis=-1, keepdims=True),
         jnp.sum(x * x, axis=-1, keepdims=True)], axis=-1)  # (cb, 2)

    if cg > 1:
        P, Pt = _group_indicators(cg, tg)
        reduce_g = lambda v: jnp.dot(P, v, preferred_element_type=jnp.float32)
        bcast_g = lambda v: jnp.dot(Pt, v, preferred_element_type=jnp.float32)
    else:
        reduce_g = bcast_g = lambda v: v

    gstats = reduce_g(stats)
    S, S2 = gstats[:, 0:1], gstats[:, 1:2]
    mean_f = S / nD
    ss_f = S2 - S * mean_f
    rstd_f = lax.rsqrt(ss_f / (nD - 1.0) + EPS)

    cvals = bcast_g(jnp.concatenate([mean_f, rstd_f], axis=-1))  # (cb, 2)
    scale = w * cvals[:, 1:2]
    shift = b - scale * cvals[:, 0:1]
    o_ref[0] = (x * scale + shift).astype(o_ref.dtype)


# --------------------------------------------------------------------------
# wrapper / tiling
# --------------------------------------------------------------------------
def _pick_groups_per_block(num_groups, cg, hw, batch, itemsize, budget_bytes):
    """Largest divisor tg of num_groups whose per-block footprint (x slab +
    in-kernel indicator matrices) fits `budget_bytes`, with the channel block
    sublane-aligned for the I/O dtype; then shrunk (if possible) so the grid
    has >= 4 steps for megacore occupancy / pipeline depth."""
    C = num_groups * cg
    sub = 8 if itemsize >= 4 else (16 if itemsize == 2 else 32)

    def aligned(t):
        cb = t * cg
        return cb == C or cb % sub == 0

    divisors = [t for t in range(num_groups, 0, -1)
                if num_groups % t == 0 and aligned(t)]
    if not divisors:
        divisors = [num_groups]

    def cost(t):
        cb = t * cg
        indicator = 0 if cg == 1 else 2 * t * cb * 4
        return cb * hw * itemsize + indicator

    fitting = [t for t in divisors if cost(t) <= budget_bytes]
    tg = fitting[0] if fitting else divisors[-1]
    # TODO(synk): if even the smallest whole-group slab exceeds the budget
    # (huge HW), HW itself would need tiling with streaming statistics.

    if batch * (num_groups // tg) < 4:
        for t in divisors:                      # descending: largest shrink
            if t < tg and batch * (num_groups // t) >= 4:
                tg = t
                break
    return tg


def mask_normalize(x, mask, weight, bias, *, skip_mask=False):
    """Pallas implementation of MaskNormalize.forward(x, mask, skip_mask).

    x: (N, C, H, W) f32 or bf16, mask: (N, 1, H, W) binary, weight/bias: (C,).
    Output dtype matches x; statistics are accumulated in f32.
    """
    N, C, H, W = x.shape
    G = N_GROUPS
    assert C % G == 0, "num_channels must be divisible by N_GROUPS"
    cg = C // G
    hw = H * W
    # TODO(synk): if hw % 128 != 0 (e.g. 14x14 maps) pad HW to a lane-dense
    # multiple of 128 with a validity mask folded into both branches.

    io_dtype = x.dtype
    x3 = x.reshape(N, C, hw)
    w2 = weight.astype(jnp.float32).reshape(C, 1)
    b2 = bias.astype(jnp.float32).reshape(C, 1)

    # generation-aware VMEM budgeting (v5e/v6e: 128 MiB, v7x: 64 MiB)
    try:
        vmem_cap = int(pltpu.get_tpu_info().vmem_capacity_bytes)
    except Exception:
        vmem_cap = 128 * 1024 * 1024
    budget = min(4 * 1024 * 1024, vmem_cap // 32)          # per x-slab
    vmem_limit = min(64 * 1024 * 1024, (3 * vmem_cap) // 4)

    itemsize = jnp.dtype(io_dtype).itemsize
    tg = _pick_groups_per_block(G, cg, hw, N, itemsize, budget)
    cb = tg * cg
    grid = (N, G // tg)

    cparams = pltpu.CompilerParams(
        dimension_semantics=("parallel", "parallel"),
        vmem_limit_bytes=vmem_limit,
    )
    x_spec = pl.BlockSpec((1, cb, hw), lambda n, j: (n, j, 0))
    vec_spec = pl.BlockSpec((cb, 1), lambda n, j: (j, 0))

    if skip_mask:
        kernel = functools.partial(_group_norm_kernel, cg=cg, tg=tg, hw=hw)
        out = pl.pallas_call(
            kernel,
            out_shape=jax.ShapeDtypeStruct((N, C, hw), io_dtype),
            grid=grid,
            in_specs=[x_spec, vec_spec, vec_spec],
            out_specs=x_spec,
            compiler_params=cparams,
        )(x3, w2, b2)
    else:
        mk3 = mask.reshape(N, 1, hw).astype(jnp.float32)
        kernel = functools.partial(_mask_group_norm_kernel, cg=cg, tg=tg, hw=hw)
        out = pl.pallas_call(
            kernel,
            out_shape=jax.ShapeDtypeStruct((N, C, hw), io_dtype),
            grid=grid,
            in_specs=[
                x_spec,
                pl.BlockSpec((1, 1, hw), lambda n, j: (n, 0, 0)),   # compact mask
                vec_spec,
                vec_spec,
            ],
            out_specs=x_spec,
            compiler_params=cparams,
        )(x3, mk3, w2, b2)
    return out.reshape(N, C, H, W)


# ---------------- pure-JAX reference (mirrors the PyTorch code) ----------------
def _ref_group_norm(x, mask, weight, bias, num_groups, eps):
    N, C, H, W = x.shape
    xg = x.reshape(N, num_groups, -1)
    D = xg.shape[-1]
    if mask is not None:
        mk = mask.reshape(N, -1)
        mk = jnp.broadcast_to(mk[:, None, :], (N, C, mk.shape[-1])).reshape(N, num_groups, -1)
        m = jnp.sum(mk, axis=-1, keepdims=True)
        n = jnp.float32(D)
        mean_bias = jnp.mean(xg, axis=-1, keepdims=True)
        mean_real = mean_bias * n / (n - m + eps)
        x_fulfill = xg * (1.0 - mk) + mean_real * mk
        mu = jnp.mean(x_fulfill, axis=-1, keepdims=True)
        var_bias = jnp.sum((x_fulfill - mu) ** 2, axis=-1, keepdims=True) / (D - 1)
        var_real = var_bias * (n - 1.0) / (n - m - 1.0 + eps)
    else:
        mean_real = jnp.mean(xg, axis=-1, keepdims=True)
        var_real = jnp.sum((xg - mean_real) ** 2, axis=-1, keepdims=True) / (D - 1)
    y = (xg - mean_real) / jnp.sqrt(var_real + eps)
    y = y.reshape(N, C, -1) * weight.reshape(1, C, 1) + bias.reshape(1, C, 1)
    return y.reshape(N, C, H, W)


def _ref_mask_normalize(x, mask, weight, bias):
    full = _ref_group_norm(x, None, weight, bias, N_GROUPS, EPS)
    masked = _ref_group_norm(x * mask, 1.0 - mask[:, 0], weight, bias, N_GROUPS, EPS)
    return full * (1.0 - mask) + masked * mask


if __name__ == "__main__":
    key = jax.random.PRNGKey(0)
    k_x, k_m, k_w, k_b, k_x2 = jax.random.split(key, 5)

    # --- case 1: C == N_GROUPS (cg == 1), f32, masked path ---
    N, C, H, W = 2, 32, 16, 16
    x = jax.random.normal(k_x, (N, C, H, W), dtype=jnp.float32)
    mask = (jax.random.uniform(k_m, (N, 1, H, W)) > 0.5).astype(jnp.float32)
    weight = 1.0 + 0.1 * jax.random.normal(k_w, (C,), dtype=jnp.float32)
    bias = 0.1 * jax.random.normal(k_b, (C,), dtype=jnp.float32)

    out = jax.block_until_ready(mask_normalize(x, mask, weight, bias))
    ref = _ref_mask_normalize(x, mask, weight, bias)
    np.testing.assert_allclose(np.asarray(out), np.asarray(ref), rtol=1e-4, atol=1e-4)

    # --- skip_mask=True: specialized kernel (no mask DMA / masked math) ---
    out_s = jax.block_until_ready(mask_normalize(x, mask, weight, bias, skip_mask=True))
    ref_s = _ref_group_norm(x, None, weight, bias, N_GROUPS, EPS)
    np.testing.assert_allclose(np.asarray(out_s), np.asarray(ref_s), rtol=1e-4, atol=1e-4)

    # --- case 2: cg > 1 exercises the in-kernel group reduce/broadcast matmuls ---
    C2 = 64
    x2 = jax.random.normal(k_x2, (N, C2, H, W), dtype=jnp.float32)
    w2_ = 1.0 + 0.1 * jax.random.normal(k_w, (C2,), dtype=jnp.float32)
    b2_ = 0.1 * jax.random.normal(k_b, (C2,), dtype=jnp.float32)
    out2 = jax.block_until_ready(mask_normalize(x2, mask, w2_, b2_))
    ref2 = _ref_mask_normalize(x2, mask, w2_, b2_)
    np.testing.assert_allclose(np.asarray(out2), np.asarray(ref2), rtol=1e-4, atol=1e-4)

    # --- bf16 I/O path (bandwidth saver on v5e); stats stay f32 in-kernel ---
    x_bf = x.astype(jnp.bfloat16)
    out_bf = jax.block_until_ready(mask_normalize(x_bf, mask, weight, bias))
    ref_bf = _ref_mask_normalize(x_bf.astype(jnp.float32), mask, weight, bias)
    np.testing.assert_allclose(np.asarray(out_bf.astype(jnp.float32)),
                               np.asarray(ref_bf), rtol=5e-2, atol=5e-2)

    print("KERNEL_OK")
</pallas_src>

<mosaic_0001>
module attributes {stable_mosaic.version = 11 : i64} {
  func.func @_mask_group_norm_kernel(%arg0: i32, %arg1: i32, %arg2: memref<1x16x256xf32, #tpu.memory_space<vmem>>, %arg3: memref<1x1x256xf32, #tpu.memory_space<vmem>>, %arg4: memref<16x1xf32, #tpu.memory_space<vmem>>, %arg5: memref<16x1xf32, #tpu.memory_space<vmem>>, %arg6: memref<1x16x256xf32, #tpu.memory_space<vmem>>) attributes {dimension_semantics = [#tpu.dimension_semantics<parallel>, #tpu.dimension_semantics<parallel>], iteration_bounds = array<i64: 2, 2>, scalar_prefetch = 0 : i64, scratch_operands = 0 : i64, tpu.core_type = #tpu.core_type<tc>, window_params = [{transform_indices = @transform_0, window_bounds = array<i64: 1, 16, 256>}, {transform_indices = @transform_1, window_bounds = array<i64: 1, 1, 256>}, {transform_indices = @transform_2, window_bounds = array<i64: 16, 1>}, {transform_indices = @transform_3, window_bounds = array<i64: 16, 1>}, {transform_indices = @transform_4, window_bounds = array<i64: 1, 16, 256>}]} {
    %c0 = arith.constant 0 : index
    %c0_0 = arith.constant 0 : index
    %c0_1 = arith.constant 0 : index
    %0 = vector.load %arg2[%c0, %c0_0, %c0_1] : memref<1x16x256xf32, #tpu.memory_space<vmem>>, vector<1x16x256xf32>
    %1 = vector.shape_cast %0 : vector<1x16x256xf32> to vector<16x256xf32>
    %c0_2 = arith.constant 0 : index
    %c0_3 = arith.constant 0 : index
    %c0_4 = arith.constant 0 : index
    %2 = vector.load %arg3[%c0_2, %c0_3, %c0_4] : memref<1x1x256xf32, #tpu.memory_space<vmem>>, vector<1x1x256xf32>
    %3 = vector.shape_cast %2 : vector<1x1x256xf32> to vector<1x256xf32>
    %c0_5 = arith.constant 0 : index
    %c0_6 = arith.constant 0 : index
    %4 = vector.load %arg4[%c0_5, %c0_6] : memref<16x1xf32, #tpu.memory_space<vmem>>, vector<16x1xf32>
    %c0_7 = arith.constant 0 : index
    %c0_8 = arith.constant 0 : index
    %5 = vector.load %arg5[%c0_7, %c0_8] : memref<16x1xf32, #tpu.memory_space<vmem>>, vector<16x1xf32>
    %cst = arith.constant dense<0.000000e+00> : vector<1xf32>
    %6 = vector.multi_reduction <add>, %3, %cst [1] : vector<1x256xf32> to vector<1xf32>
    %7 = vector.shape_cast %6 : vector<1xf32> to vector<1x1xf32>
    %cst_9 = arith.constant 2.560000e+02 : f32
    %8 = vector.broadcast %cst_9 : f32 to vector<1x1xf32>
    %9 = arith.subf %8, %7 : vector<1x1xf32>
    %cst_10 = arith.constant 1.000000e+00 : f32
    %10 = vector.broadcast %cst_10 : f32 to vector<1x1xf32>
    %11 = arith.mulf %10, %9 : vector<1x1xf32>
    %12 = arith.mulf %1, %1 : vector<16x256xf32>
    %13 = vector.broadcast %3 : vector<1x256xf32> to vector<16x256xf32>
    %14 = arith.mulf %1, %13 : vector<16x256xf32>
    %cst_11 = arith.constant dense<0.000000e+00> : vector<16xf32>
    %15 = vector.multi_reduction <add>, %1, %cst_11 [1] : vector<16x256xf32> to vector<16xf32>
    %16 = vector.shape_cast %15 : vector<16xf32> to vector<16x1xf32>
    %cst_12 = arith.constant dense<0.000000e+00> : vector<16xf32>
    %17 = vector.multi_reduction <add>, %14, %cst_12 [1] : vector<16x256xf32> to vector<16xf32>
    %18 = vector.shape_cast %17 : vector<16xf32> to vector<16x1xf32>
    %cst_13 = arith.constant dense<0.000000e+00> : vector<16xf32>
    %19 = vector.multi_reduction <add>, %12, %cst_13 [1] : vector<16x256xf32> to vector<16xf32>
    %20 = vector.shape_cast %19 : vector<16xf32> to vector<16x1xf32>
    %21 = vector.broadcast %3 : vector<1x256xf32> to vector<16x256xf32>
    %22 = arith.mulf %12, %21 : vector<16x256xf32>
    %cst_14 = arith.constant dense<0.000000e+00> : vector<16xf32>
    %23 = vector.multi_reduction <add>, %22, %cst_14 [1] : vector<16x256xf32> to vector<16xf32>
    %24 = vector.shape_cast %23 : vector<16xf32> to vector<16x1xf32>
    %25 = tpu.concatenate %16, %18, %20, %24 in 1 : vector<16x1xf32>, vector<16x1xf32>, vector<16x1xf32>, vector<16x1xf32> -> vector<16x4xf32>
    %26 = vector.extract_strided_slice %25 {offsets = [0, 0], sizes = [16, 1], strides = [1, 1]} : vector<16x4xf32> to vector<16x1xf32>
    %27 = vector.extract_strided_slice %25 {offsets = [0, 1], sizes = [16, 1], strides = [1, 1]} : vector<16x4xf32> to vector<16x1xf32>
    %28 = vector.extract_strided_slice %25 {offsets = [0, 2], sizes = [16, 1], strides = [1, 1]} : vector<16x4xf32> to vector<16x1xf32>
    %29 = vector.extract_strided_slice %25 {offsets = [0, 3], sizes = [16, 1], strides = [1, 1]} : vector<16x4xf32> to vector<16x1xf32>
    %cst_15 = arith.constant 2.560000e+02 : f32
    %30 = vector.broadcast %cst_15 : f32 to vector<16x1xf32>
    %31 = arith.divf %26, %30 : vector<16x1xf32>
    %32 = arith.mulf %26, %31 : vector<16x1xf32>
    %33 = arith.subf %28, %32 : vector<16x1xf32>
    %cst_16 = arith.constant 2.550000e+02 : f32
    %34 = vector.broadcast %cst_16 : f32 to vector<16x1xf32>
    %35 = arith.divf %33, %34 : vector<16x1xf32>
    %cst_17 = arith.constant 9.99999997E-7 : f32
    %36 = vector.broadcast %cst_17 : f32 to vector<16x1xf32>
    %37 = arith.addf %35, %36 : vector<16x1xf32>
    %38 = math.rsqrt %37 : vector<16x1xf32>
    %cst_18 = arith.constant 2.560000e+02 : f32
    %39 = vector.broadcast %cst_18 : f32 to vector<1x1xf32>
    %40 = arith.subf %39, %11 : vector<1x1xf32>
    %cst_19 = arith.constant 9.99999997E-7 : f32
    %41 = vector.broadcast %cst_19 : f32 to vector<1x1xf32>
    %42 = arith.addf %40, %41 : vector<1x1xf32>
    %43 = vector.broadcast %42 : vector<1x1xf32> to vector<16x1xf32>
    %44 = arith.divf %27, %43 : vector<16x1xf32>
    %45 = vector.broadcast %11 : vector<1x1xf32> to vector<16x1xf32>
    %46 = arith.mulf %45, %44 : vector<16x1xf32>
    %47 = arith.addf %27, %46 : vector<16x1xf32>
    %cst_20 = arith.constant 2.560000e+02 : f32
    %48 = vector.broadcast %cst_20 : f32 to vector<16x1xf32>
    %49 = arith.divf %47, %48 : vector<16x1xf32>
    %cst_21 = arith.constant 2.000000e+00 : f32
    %50 = vector.broadcast %cst_21 : f32 to vector<16x1xf32>
    %51 = arith.mulf %50, %49 : vector<16x1xf32>
    %52 = arith.mulf %51, %27 : vector<16x1xf32>
    %53 = arith.subf %29, %52 : vector<16x1xf32>
    %54 = arith.mulf %49, %49 : vector<16x1xf32>
    %cst_22 = arith.constant 2.560000e+02 : f32
    %55 = vector.broadcast %cst_22 : f32 to vector<1x1xf32>
    %56 = arith.subf %55, %11 : vector<1x1xf32>
    %57 = vector.broadcast %56 : vector<1x1xf32> to vector<16x1xf32>
    %58 = arith.mulf %54, %57 : vector<16x1xf32>
    %59 = arith.addf %53, %58 : vector<16x1xf32>
    %60 = arith.subf %44, %49 : vector<16x1xf32>
    %61 = arith.mulf %60, %60 : vector<16x1xf32>
    %62 = vector.broadcast %11 : vector<1x1xf32> to vector<16x1xf32>
    %63 = arith.mulf %62, %61 : vector<16x1xf32>
    %64 = arith.addf %59, %63 : vector<16x1xf32>
    %cst_23 = arith.constant 2.560000e+02 : f32
    %65 = vector.broadcast %cst_23 : f32 to vector<1x1xf32>
    %66 = arith.subf %65, %11 : vector<1x1xf32>
    %cst_24 = arith.constant 1.000000e+00 : f32
    %67 = vector.broadcast %cst_24 : f32 to vector<1x1xf32>
    %68 = arith.subf %66, %67 : vector<1x1xf32>
    %cst_25 = arith.constant 9.99999997E-7 : f32
    %69 = vector.broadcast %cst_25 : f32 to vector<1x1xf32>
    %70 = arith.addf %68, %69 : vector<1x1xf32>
    %71 = vector.broadcast %70 : vector<1x1xf32> to vector<16x1xf32>
    %72 = arith.divf %64, %71 : vector<16x1xf32>
    %cst_26 = arith.constant 9.99999997E-7 : f32
    %73 = vector.broadcast %cst_26 : f32 to vector<16x1xf32>
    %74 = arith.addf %72, %73 : vector<16x1xf32>
    %75 = math.rsqrt %74 : vector<16x1xf32>
    %76 = tpu.concatenate %31, %38, %44, %75 in 1 : vector<16x1xf32>, vector<16x1xf32>, vector<16x1xf32>, vector<16x1xf32> -> vector<16x4xf32>
    %77 = vector.extract_strided_slice %76 {offsets = [0, 1], sizes = [16, 1], strides = [1, 1]} : vector<16x4xf32> to vector<16x1xf32>
    %78 = arith.mulf %4, %77 : vector<16x1xf32>
    %79 = vector.extract_strided_slice %76 {offsets = [0, 0], sizes = [16, 1], strides = [1, 1]} : vector<16x4xf32> to vector<16x1xf32>
    %80 = arith.mulf %78, %79 : vector<16x1xf32>
    %81 = arith.subf %5, %80 : vector<16x1xf32>
    %82 = vector.extract_strided_slice %76 {offsets = [0, 3], sizes = [16, 1], strides = [1, 1]} : vector<16x4xf32> to vector<16x1xf32>
    %83 = arith.mulf %4, %82 : vector<16x1xf32>
    %84 = vector.extract_strided_slice %76 {offsets = [0, 2], sizes = [16, 1], strides = [1, 1]} : vector<16x4xf32> to vector<16x1xf32>
    %85 = arith.mulf %83, %84 : vector<16x1xf32>
    %86 = arith.subf %5, %85 : vector<16x1xf32>
    %cst_27 = arith.constant 0.000000e+00 : f32
    %87 = vector.broadcast %cst_27 : f32 to vector<1x256xf32>
    %88 = arith.cmpf ogt, %3, %87 : vector<1x256xf32>
    %89 = vector.shape_cast %88 : vector<1x256xi1> to vector<1x256xi1>
    %90 = vector.broadcast %89 : vector<1x256xi1> to vector<16x256xi1>
    %91 = vector.shape_cast %83 : vector<16x1xf32> to vector<16x1xf32>
    %92 = vector.broadcast %91 : vector<16x1xf32> to vector<16x256xf32>
    %93 = vector.shape_cast %78 : vector<16x1xf32> to vector<16x1xf32>
    %94 = vector.broadcast %93 : vector<16x1xf32> to vector<16x256xf32>
    %95 = arith.select %90, %92, %94 : vector<16x256xi1>, vector<16x256xf32>
    %96 = vector.shape_cast %88 : vector<1x256xi1> to vector<1x256xi1>
    %97 = vector.broadcast %96 : vector<1x256xi1> to vector<16x256xi1>
    %98 = vector.shape_cast %86 : vector<16x1xf32> to vector<16x1xf32>
    %99 = vector.broadcast %98 : vector<16x1xf32> to vector<16x256xf32>
    %100 = vector.shape_cast %81 : vector<16x1xf32> to vector<16x1xf32>
    %101 = vector.broadcast %100 : vector<16x1xf32> to vector<16x256xf32>
    %102 = arith.select %97, %99, %101 : vector<16x256xi1>, vector<16x256xf32>
    %103 = arith.mulf %1, %95 : vector<16x256xf32>
    %104 = arith.addf %103, %102 : vector<16x256xf32>
    %c0_28 = arith.constant 0 : index
    %c0_29 = arith.constant 0 : index
    %c0_30 = arith.constant 0 : index
    %105 = vector.load %arg6[%c0_28, %c0_29, %c0_30] : memref<1x16x256xf32, #tpu.memory_space<vmem>>, vector<1x16x256xf32>
    %106 = vector.shape_cast %105 : vector<1x16x256xf32> to vector<16x256xf32>
    %107 = vector.shape_cast %104 : vector<16x256xf32> to vector<1x16x256xf32>
    tpu.vector_store %arg6[%c0_28, %c0_29, %c0_30], %107 {strides = array<i32>} : memref<1x16x256xf32, #tpu.memory_space<vmem>>, vector<1x16x256xf32>,
    return
  }
  func.func @transform_0(%arg0: i32, %arg1: i32) -> (i32, i32, i32) {
    %c0_i32 = arith.constant 0 : i32
    %c0_i32_0 = arith.constant 0 : i32
    return %arg0, %arg1, %c0_i32 : i32, i32, i32
  }
  func.func @transform_1(%arg0: i32, %arg1: i32) -> (i32, i32, i32) {
    %c0_i32 = arith.constant 0 : i32
    %c0_i32_0 = arith.constant 0 : i32
    %c0_i32_1 = arith.constant 0 : i32
    return %arg0, %c0_i32, %c0_i32_0 : i32, i32, i32
  }
  func.func @transform_2(%arg0: i32, %arg1: i32) -> (i32, i32) {
    %c0_i32 = arith.constant 0 : i32
    %c0_i32_0 = arith.constant 0 : i32
    return %arg1, %c0_i32 : i32, i32
  }
  func.func @transform_3(%arg0: i32, %arg1: i32) -> (i32, i32) {
    %c0_i32 = arith.constant 0 : i32
    %c0_i32_0 = arith.constant 0 : i32
    return %arg1, %c0_i32 : i32, i32
  }
  func.func @transform_4(%arg0: i32, %arg1: i32) -> (i32, i32, i32) {
    %c0_i32 = arith.constant 0 : i32
    %c0_i32_0 = arith.constant 0 : i32
    return %arg0, %arg1, %c0_i32 : i32, i32, i32
  }
}

</mosaic_0001>

<llo_original>
// kernel: tpu_custom_call.1
$region0: #{tpu_custom_call.1}
  #allocation0 [shape = 'u32[]', space=smem, size = 0x4, offset = 0x4, fixed_abs, tag = 'smem constant byte address 0x4 - core index']
  #allocation1 [shape = 'u32[144,128]{1,0:T(1,128)}', space=vmem, size = 0x12000, scoped, tag = 'internal scratch']
  %s0 = inlined_call_operand.hbm [shape: f32[2,32,256], index: 0, kind: input, shape index: {}]
  %s1 = inlined_call_operand.hbm [shape: f32[2,1,256], index: 1, kind: input, shape index: {}]
  %s2 = inlined_call_operand.hbm [shape: f32[32,1], index: 2, kind: input, shape index: {}]
  %s3 = inlined_call_operand.hbm [shape: f32[32,1], index: 3, kind: input, shape index: {}]
  %s4 = inlined_call_operand.hbm [shape: f32[2,32,256], index: 4, kind: output, shape index: {}]
  %s5 = sld [smem:[#allocation0]]
  $region65: #{tpu_custom_call.1} parent=0
    _
  %s7 = ssub.s32 1, %s5
  %s8 = scalar_select 0, %s7, %s5
  $region1: #{tpu_custom_call.1} parent=0
    #allocation2 [shape = 'u8[32768]{0}', space=vmem, size = 0x8000, scoped, tag = 'input window, operand 0']
    #allocation3 [shape = 's32[2]{0}', space=sflag, size = 0x8, scoped, tag = 'scoped memory for tpu_custom_call.1']
    #allocation4 [shape = 's32[2]{0}', space=sflag, size = 0x8, scoped, tag = 'scoped memory for tpu_custom_call.1']
    #allocation5 [shape = 'u8[2048]{0}', space=vmem, size = 0x800, scoped, tag = 'input window, operand 1']
    #allocation6 [shape = 's32[2]{0}', space=sflag, size = 0x8, scoped, tag = 'scoped memory for tpu_custom_call.1']
    #allocation7 [shape = 'u8[16384]{0}', space=vmem, size = 0x4000, scoped, tag = 'input window, operand 2']
    #allocation8 [shape = 'u8[16384]{0}', space=vmem, size = 0x4000, scoped, tag = 'input window, operand 3']
    #allocation9 [shape = 's32[2]{0}', space=sflag, size = 0x8, scoped, tag = 'scoped memory for tpu_custom_call.1']
    #allocation10 [shape = 'u8[32768]{0}', space=vmem, size = 0x8000, scoped, tag = 'output window, operand 0']
    %9 = vsyncpa [#allocation3], 0
    %s10 = scalar_lea.sflag [#allocation3], 1
    %11 = vsyncpa %s10, 0
    %12 = vsyncpa [#allocation6], 0
    %s13 = scalar_lea.sflag [#allocation6], 1
    %14 = vsyncpa %s13, 0
    %15 = vsyncpa [#allocation9], 0
    %s16 = scalar_lea.sflag [#allocation9], 1
    %17 = vsyncpa %s16, 0
    %18 = vsyncpa [#allocation4], 0
    %s19 = scalar_lea.sflag [#allocation4], 1
    %20 = vsyncpa %s19, 0
    loop: start=0, step=1, limit=6
    $region2: #{tpu_custom_call.1} parent=1 // loop_pre_header
      _
    $region3: #{tpu_custom_call.1} parent=1 // loop_header
      %s22 = sphi 0, %s26
      %p23 = scmp.ge.s32.totalorder %s22, 6
      %s29 = sphi 0, %s41
      %s30 = sphi 0, %s37
      %s31 = sphi 0, %s29
      %s32 = sphi 0, %s30
      %s33 = sphi 0, %s31
      %s34 = sphi 0, %s32
      %s46 = sphi 0, %s48
      %s49 = sphi 0, %s46
      %s50 = sphi 0, %s49
      %s66 = sphi 0, %s50
      %s72 = sphi 0, %s74
      %s75 = sphi 0, %s72
      %s76 = sphi 0, %s75
      %s92 = sphi 0, %s76
      %s98 = sphi 0, %s100
      %s101 = sphi 0, %s98
      %s102 = sphi 0, %s101
      %s118 = sphi 0, %s102
      %s124 = sphi 0, %s126
      %s127 = sphi 0, %s124
      %s128 = sphi 0, %s127
      %s144 = sphi 0, %s128
      %s152 = sphi 0, %s154
      %s155 = sphi 0, %s152
      %s156 = sphi 0, %s155
      %s172 = sphi 0, %s156
    $region4: #{tpu_custom_call.1} parent=1 // loop_header_branch
      %25 = sbr.rel (%p23) target = $region8
    $region5: #{tpu_custom_call.1} parent=1 // loop_body
      %s27 = ssub.s32 %s22, 1
      %s28 = ssub.s32 %s22, 2
      %s35 = sadd.s32 1, %s30
      %p36 = scmp.ge.s32.totalorder %s35, 2
      %s37 = scalar_select %p36, 0, %s35
      %s38 = sadd.s32 1, %s29
      %s39 = scalar_select %p36, %s38, %s29
      %p40 = scmp.ge.s32.totalorder %s39, 2
      %s41 = scalar_select %p40, 0, %s39
      %s42 = ssub.s32 %s29, %s41
      %s43 = ssub.s32 %s30, %s37
      %s44 = sor.u32 %s42, %s43
      %p45 = scmp.eq.s32.totalorder %s44, 0
      %s47 = sadd.s32 %s46, 1
      %s48 = scalar_select %p45, %s46, %s47
      %p51 = pneg %p45
      %p52 = scmp.eq.s32.totalorder %s22, 3
      %p53 = por %p51, %p52
      %p54 = scmp.ne.s32.totalorder %s46, %s49
      %p55 = scmp.eq.s32.totalorder %s22, 0
      %p56 = por %p54, %p55
      %p57 = scmp.ne.s32.totalorder %s46, %s49
      %p58 = scmp.eq.s32.totalorder %s27, 3
      %p59 = por %p57, %p58
      %p60 = scmp.ne.s32.totalorder %s49, %s50
      %p61 = scmp.eq.s32.totalorder %s27, 0
      %p62 = por %p60, %p61
      %p63 = scmp.ne.s32.totalorder %s49, %s50
      %p64 = scmp.eq.s32.totalorder %s28, 3
      %p65 = por %p63, %p64
      %p67 = scmp.ne.s32.totalorder %s50, %s66
      %p68 = scmp.eq.s32.totalorder %s28, 0
      %p69 = por %p67, %p68
      %s70 = ssub.s32 %s29, %s41
      %p71 = scmp.eq.s32.totalorder %s70, 0
      %s73 = sadd.s32 %s72, 1
      %s74 = scalar_select %p71, %s72, %s73
      %p77 = pneg %p71
      %p78 = scmp.eq.s32.totalorder %s22, 3
      %p79 = por %p77, %p78
      %p80 = scmp.ne.s32.totalorder %s72, %s75
      %p81 = scmp.eq.s32.totalorder %s22, 0
      %p82 = por %p80, %p81
      %p83 = scmp.ne.s32.totalorder %s72, %s75
      %p84 = scmp.eq.s32.totalorder %s27, 3
      %p85 = por %p83, %p84
      %p86 = scmp.ne.s32.totalorder %s75, %s76
      %p87 = scmp.eq.s32.totalorder %s27, 0
      %p88 = por %p86, %p87
      %p89 = scmp.ne.s32.totalorder %s75, %s76
      %p90 = scmp.eq.s32.totalorder %s28, 3
      %p91 = por %p89, %p90
      %p93 = scmp.ne.s32.totalorder %s76, %s92
      %p94 = scmp.eq.s32.totalorder %s28, 0
      %p95 = por %p93, %p94
      %s96 = ssub.s32 %s30, %s37
      %p97 = scmp.eq.s32.totalorder %s96, 0
      %s99 = sadd.s32 %s98, 1
      %s100 = scalar_select %p97, %s98, %s99
      %p103 = pneg %p97
      %p104 = scmp.eq.s32.totalorder %s22, 3
      %p105 = por %p103, %p104
      %p106 = scmp.ne.s32.totalorder %s98, %s101
      %p107 = scmp.eq.s32.totalorder %s22, 0
      %p108 = por %p106, %p107
      %p109 = scmp.ne.s32.totalorder %s98, %s101
      %p110 = scmp.eq.s32.totalorder %s27, 3
      %p111 = por %p109, %p110
      %p112 = scmp.ne.s32.totalorder %s101, %s102
      %p113 = scmp.eq.s32.totalorder %s27, 0
      %p114 = por %p112, %p113
      %p115 = scmp.ne.s32.totalorder %s101, %s102
      %p116 = scmp.eq.s32.totalorder %s28, 3
      %p117 = por %p115, %p116
      %p119 = scmp.ne.s32.totalorder %s102, %s118
      %p120 = scmp.eq.s32.totalorder %s28, 0
      %p121 = por %p119, %p120
      %s122 = ssub.s32 %s30, %s37
      %p123 = scmp.eq.s32.totalorder %s122, 0
      %s125 = sadd.s32 %s124, 1
      %s126 = scalar_select %p123, %s124, %s125
      %p129 = pneg %p123
      %p130 = scmp.eq.s32.totalorder %s22, 3
      %p131 = por %p129, %p130
      %p132 = scmp.ne.s32.totalorder %s124, %s127
      %p133 = scmp.eq.s32.totalorder %s22, 0
      %p134 = por %p132, %p133
      %p135 = scmp.ne.s32.totalorder %s124, %s127
      %p136 = scmp.eq.s32.totalorder %s27, 3
      %p137 = por %p135, %p136
      %p138 = scmp.ne.s32.totalorder %s127, %s128
      %p139 = scmp.eq.s32.totalorder %s27, 0
      %p140 = por %p138, %p139
      %p141 = scmp.ne.s32.totalorder %s127, %s128
      %p142 = scmp.eq.s32.totalorder %s28, 3
      %p143 = por %p141, %p142
      %p145 = scmp.ne.s32.totalorder %s128, %s144
      %p146 = scmp.eq.s32.totalorder %s28, 0
      %p147 = por %p145, %p146
      %s148 = ssub.s32 %s29, %s41
      %s149 = ssub.s32 %s30, %s37
      %s150 = sor.u32 %s148, %s149
      %p151 = scmp.eq.s32.totalorder %s150, 0
      %s153 = sadd.s32 %s152, 1
      %s154 = scalar_select %p151, %s152, %s153
      %p157 = pneg %p151
      %p158 = scmp.eq.s32.totalorder %s22, 3
      %p159 = por %p157, %p158
      %p160 = scmp.ne.s32.totalorder %s152, %s155
      %p161 = scmp.eq.s32.totalorder %s22, 0
      %p162 = por %p160, %p161
      %p163 = scmp.ne.s32.totalorder %s152, %s155
      %p164 = scmp.eq.s32.totalorder %s27, 3
      %p165 = por %p163, %p164
      %p166 = scmp.ne.s32.totalorder %s155, %s156
      %p167 = scmp.eq.s32.totalorder %s27, 0
      %p168 = por %p166, %p167
      %p169 = scmp.ne.s32.totalorder %s155, %s156
      %p170 = scmp.eq.s32.totalorder %s28, 3
      %p171 = por %p169, %p170
      %p173 = scmp.ne.s32.totalorder %s156, %s172
      %p174 = scmp.eq.s32.totalorder %s28, 0
      %p175 = por %p173, %p174
      %p176 = scmp.le.s32.totalorder 1, %s22
      %p177 = scmp.lt.s32.totalorder %s22, 5
      %p178 = pnand %p176, %p177
      %p179 = pneg %p178
      // Predicated region
      $region9: #{tpu_custom_call.1} parent=5 // pred_check
        _
      $region10: #{tpu_custom_call.1} parent=5 // pred_check_branch
        %181 = sbr.rel (%p178) target = $region12
      $region11: #{tpu_custom_call.1} parent=5 // pred_region
        %s182 = ssub.s32 %s22, 1
      $region12: #{tpu_custom_call.1} parent=5 // pred_fallthru
        _
      %p183 = scmp.lt.s32.totalorder %s22, 4
      // Predicated region
      $region13: #{tpu_custom_call.1} parent=5 // pred_check
        %p184 = pneg %p183
      $region14: #{tpu_custom_call.1} parent=5 // pred_check_branch
        %186 = sbr.rel (%p184) target = $region16
      $region15: #{tpu_custom_call.1} parent=5 // pred_region
        // Predicated region
        $region17: #{tpu_custom_call.1} parent=15 // pred_check
          %p187 = pneg %p56
        $region18: #{tpu_custom_call.1} parent=15 // pred_check_branch
          %189 = sbr.rel (%p187) target = $region20
        $region19: #{tpu_custom_call.1} parent=15 // pred_region
          %s190 = sand.u32 %s46, 1
          %s191 = scalar_lea.sflag [#allocation3], %s190
          %s192 = sand.u32 %s46, 1
          %s193 = smul.addr %s192, 32
          %s194 = scalar_lea.vmem [#allocation2], %s193
          %s195 = smul.u32 2, %s30
          %s197 = ssub.s32 512, 512
          %198 = vsyncadd %s191, %s197
          %s199 = smul.addr %s195, 2
          %s200 = smul.addr %s29, 8
          %s201 = sadd.s32 %s199, %s200
          %s202 = smul.addr %s201, 128
          %s203 = scalar_lea.hbm %s0, %s202
          %s204 = sshll.u32 %s194, 4
          %s205 = int_to_ptr.vmem [resolvable:$true] %s204
          %210 = dma.hbm_to_vmem [thread:$0]  %s203, 512, %s205, %s191, 256, 256, 16
        $region20: #{tpu_custom_call.1} parent=15 // pred_fallthru
          _
        // Predicated region
        $region21: #{tpu_custom_call.1} parent=15 // pred_check
          %p211 = pneg %p82
        $region22: #{tpu_custom_call.1} parent=15 // pred_check_branch
          %213 = sbr.rel (%p211) target = $region24
        $region23: #{tpu_custom_call.1} parent=15 // pred_region
          %s214 = sand.u32 %s22, 1
          %s215 = scalar_lea.sflag [#allocation6], %s214
          %s216 = sand.u32 %s72, 1
          %s217 = smul.addr %s216, 2
          %s218 = scalar_lea.vmem [#allocation5], %s217
          %s220 = ssub.s32 32, 32
          %221 = vsyncadd %s215, %s220
          %s222 = smul.addr %s29, 2
          %s223 = smul.addr %s222, 16
          %s224 = scalar_lea.hbm %s1, %s223
          %s226 = sshll.u32 %s218, 4
          %s227 = int_to_ptr.vmem [resolvable:$true] %s226
          %229 = dma.hbm_to_vmem [thread:$0]  %s224, 32, %s227, %s215
        $region24: #{tpu_custom_call.1} parent=15 // pred_fallthru
          _
        // Predicated region
        $region25: #{tpu_custom_call.1} parent=15 // pred_check
          %p230 = pneg %p108
        $region26: #{tpu_custom_call.1} parent=15 // pred_check_branch
          %232 = sbr.rel (%p230) target = $region28
        $region27: #{tpu_custom_call.1} parent=15 // pred_region
          %s233 = sand.u32 %s22, 1
          %s234 = scalar_lea.sflag [#allocation6], %s233
          %s235 = sand.u32 %s98, 1
          %s236 = smul.addr %s235, 16
          %s237 = scalar_lea.vmem [#allocation7], %s236
          %s238 = smul.u32 2, %s30
          %s240 = ssub.s32 256, 256
          %241 = vsyncadd %s234, %s240
          %s242 = smul.addr %s238, 128
          %s243 = scalar_lea.hbm %s2, %s242
          %s244 = sshll.u32 %s237, 4
          %s245 = int_to_ptr.vmem [resolvable:$true] %s244
          %250 = dma.hbm_to_vmem [thread:$0]  %s243, 256, %s245, %s234, 128, 128, 8
        $region28: #{tpu_custom_call.1} parent=15 // pred_fallthru
          _
        // Predicated region
        $region29: #{tpu_custom_call.1} parent=15 // pred_check
          %p251 = pneg %p134
        $region30: #{tpu_custom_call.1} parent=15 // pred_check_branch
          %253 = sbr.rel (%p251) target = $region32
        $region31: #{tpu_custom_call.1} parent=15 // pred_region
          %s254 = sand.u32 %s124, 1
          %s255 = scalar_lea.sflag [#allocation9], %s254
          %s256 = sand.u32 %s124, 1
          %s257 = smul.addr %s256, 16
          %s258 = scalar_lea.vmem [#allocation8], %s257
          %s259 = smul.u32 2, %s30
          %s261 = ssub.s32 256, 256
          %262 = vsyncadd %s255, %s261
          %s263 = smul.addr %s259, 128
          %s264 = scalar_lea.hbm %s3, %s263
          %s265 = sshll.u32 %s258, 4
          %s266 = int_to_ptr.vmem [resolvable:$true] %s265
          %271 = dma.hbm_to_vmem [thread:$0]  %s264, 256, %s266, %s255, 128, 128, 8
        $region32: #{tpu_custom_call.1} parent=15 // pred_fallthru
          _
      $region16: #{tpu_custom_call.1} parent=5 // pred_fallthru
        _
      %p272 = scmp.le.s32.totalorder 1, %s22
      %p273 = scmp.lt.s32.totalorder %s22, 5
      %p274 = pnand %p272, %p273
      %p275 = pneg %p274
      // Predicated region
      $region33: #{tpu_custom_call.1} parent=5 // pred_check
        _
      $region34: #{tpu_custom_call.1} parent=5 // pred_check_branch
        %277 = sbr.rel (%p274) target = $region36
      $region35: #{tpu_custom_call.1} parent=5 // pred_region
        %s278 = ssub.s32 %s22, 1
        %s279 = sand.u32 %s49, 1
        %s280 = scalar_lea.sflag [#allocation3], %s279
        %s281 = sand.u32 %s49, 1
        %s282 = smul.addr %s281, 32
        %s283 = scalar_lea.vmem [#allocation2], %s282
        // Predicated region
        $region37: #{tpu_custom_call.1} parent=35 // pred_check
          %p284 = pneg %p62
        $region38: #{tpu_custom_call.1} parent=35 // pred_check_branch
          %286 = sbr.rel (%p284) target = $region40
        $region39: #{tpu_custom_call.1} parent=35 // pred_region
          %287 = dma.done %s280, 512
        $region40: #{tpu_custom_call.1} parent=35 // pred_fallthru
          _
        %s288 = sand.u32 %s27, 1
        %s289 = scalar_lea.sflag [#allocation6], %s288
        %s290 = sand.u32 %s75, 1
        %s291 = smul.addr %s290, 2
        %s292 = scalar_lea.vmem [#allocation5], %s291
        // Predicated region
        $region41: #{tpu_custom_call.1} parent=35 // pred_check
          %p293 = pneg %p88
        $region42: #{tpu_custom_call.1} parent=35 // pred_check_branch
          %295 = sbr.rel (%p293) target = $region44
        $region43: #{tpu_custom_call.1} parent=35 // pred_region
          %296 = dma.done %s289, 32
        $region44: #{tpu_custom_call.1} parent=35 // pred_fallthru
          _
        %s297 = sand.u32 %s27, 1
        %s298 = scalar_lea.sflag [#allocation6], %s297
        %s299 = sand.u32 %s101, 1
        %s300 = smul.addr %s299, 16
        %s301 = scalar_lea.vmem [#allocation7], %s300
        // Predicated region
        $region45: #{tpu_custom_call.1} parent=35 // pred_check
          %p302 = pneg %p114
        $region46: #{tpu_custom_call.1} parent=35 // pred_check_branch
          %304 = sbr.rel (%p302) target = $region48
        $region47: #{tpu_custom_call.1} parent=35 // pred_region
          %305 = dma.done %s298, 256
        $region48: #{tpu_custom_call.1} parent=35 // pred_fallthru
          _
        %s306 = sand.u32 %s127, 1
        %s307 = scalar_lea.sflag [#allocation9], %s306
        %s308 = sand.u32 %s127, 1
        %s309 = smul.addr %s308, 16
        %s310 = scalar_lea.vmem [#allocation8], %s309
        // Predicated region
        $region49: #{tpu_custom_call.1} parent=35 // pred_check
          %p311 = pneg %p140
        $region50: #{tpu_custom_call.1} parent=35 // pred_check_branch
          %313 = sbr.rel (%p311) target = $region52
        $region51: #{tpu_custom_call.1} parent=35 // pred_region
          %314 = dma.done %s307, 256
        $region52: #{tpu_custom_call.1} parent=35 // pred_fallthru
          _
        %s315 = sand.u32 %s49, 1
        %s316 = scalar_lea.sflag [#allocation3], %s315
        %s317 = sand.u32 %s49, 1
        %s318 = smul.addr %s317, 32
        %s319 = scalar_lea.vmem [#allocation2], %s318
        %p320 = pneg %p62
        %p321 = pneg %p59
        %s322 = sand.u32 %s27, 1
        %s323 = scalar_lea.sflag [#allocation6], %s322
        %s324 = sand.u32 %s75, 1
        %s325 = smul.addr %s324, 2
        %s326 = scalar_lea.vmem [#allocation5], %s325
        %p327 = pneg %p88
        %p328 = pneg %p85
        %s329 = sand.u32 %s27, 1
        %s330 = scalar_lea.sflag [#allocation6], %s329
        %s331 = sand.u32 %s101, 1
        %s332 = smul.addr %s331, 16
        %s333 = scalar_lea.vmem [#allocation7], %s332
        %p334 = pneg %p114
        %p335 = pneg %p111
        %s336 = sand.u32 %s127, 1
        %s337 = scalar_lea.sflag [#allocation9], %s336
        %s338 = sand.u32 %s127, 1
        %s339 = smul.addr %s338, 16
        %s340 = scalar_lea.vmem [#allocation8], %s339
        %p341 = pneg %p140
        %p342 = pneg %p137
        %p343 = pneg %p168
        %p344 = pneg %p165
        %s345 = sand.u32 %s155, 1
        %s346 = scalar_lea.sflag [#allocation4], %s345
        %s347 = sand.u32 %s155, 1
        %s348 = smul.addr %s347, 32
        %s349 = scalar_lea.vmem [#allocation10], %s348
        %s350 = smul.u32 2, %s32
        %s351 = smul.u32 2, %s32
        %s352 = smul.u32 2, %s32
        %s353 = smul.u32 2, %s32
        %v354 = vld [vmem:[%s283] sm:$0xff]
        %v355 = vld [vmem:[%s283 + $0x8] sm:$0xff]
        %v356 = vld [vmem:[%s283 + $0x10] sm:$0xff]
        %v357 = vld [vmem:[%s283 + $0x18] sm:$0xff]
        %v358 = vld [vmem:[%s292] sm:$0x3]
        %v359 = vld [vmem:[%s301] sm:$0xff]
        %v360 = vld [vmem:[%s301 + $0x8] sm:$0xff]
        %v361 = vld [vmem:[%s310] sm:$0xff]
        %v362 = vld [vmem:[%s310 + $0x8] sm:$0xff]
        %v364 = vlaneseq
        %v365 = vshrl.u32 %v364, 7
        %v366 = vsub.s32 0, %v365
        %v367 = vrot.slane %v358, %v366
        %v368 = vlaneseq
        %v369 = vshrl.u32 %v368, 7
        %v370 = vsub.s32 1, %v369
        %v371 = vrot.slane %v358, %v370
        %vm374 = vcmask 1040384
        %v375 = vsel %vm374, %v367, 0.0
        %v376 = vsel %vm374, %v371, 0.0
        %v377 = vadd.f32 %v375, %v376
        %378 = vadd.xlane.f32.xlu0 %v377
        %v379 = vpop.xlane.xlu0 %378
        %v380 = vsub.f32 256.0, %v379
        %v381 = vmul.f32 %v354, %v354
        %v382 = vmul.f32 %v355, %v355
        %v383 = vmul.f32 %v356, %v356
        %v384 = vmul.f32 %v357, %v357
        %v385 = vmul.f32 %v354, %v367
        %v386 = vmul.f32 %v355, %v371
        %v387 = vmul.f32 %v356, %v367
        %v388 = vmul.f32 %v357, %v371
        %v389 = vadd.f32 %v354, %v355
        %390 = vadd.xlane.f32.xlu0 %v389
        %v391 = vpop.xlane.xlu0 %390
        %v392 = vadd.f32 %v356, %v357
        %393 = vadd.xlane.f32.xlu0 %v392
        %v394 = vpop.xlane.xlu0 %393
        %v395 = vadd.f32 %v385, %v386
        %396 = vadd.xlane.f32.xlu0 %v395
        %v397 = vpop.xlane.xlu0 %396
        %v398 = vadd.f32 %v387, %v388
        %399 = vadd.xlane.f32.xlu0 %v398
        %v400 = vpop.xlane.xlu0 %399
        %v401 = vadd.f32 %v381, %v382
        %402 = vadd.xlane.f32.xlu0 %v401
        %v403 = vpop.xlane.xlu0 %402
        %v404 = vadd.f32 %v383, %v384
        %405 = vadd.xlane.f32.xlu0 %v404
        %v406 = vpop.xlane.xlu0 %405
        %v407 = vmul.f32 %v381, %v367
        %v408 = vmul.f32 %v382, %v371
        %v409 = vmul.f32 %v383, %v367
        %v410 = vmul.f32 %v384, %v371
        %v411 = vadd.f32 %v407, %v408
        %412 = vadd.xlane.f32.xlu0 %v411
        %v413 = vpop.xlane.xlu0 %412
        %v414 = vadd.f32 %v409, %v410
        %415 = vadd.xlane.f32.xlu0 %v414
        %v416 = vpop.xlane.xlu0 %415
        %vm417 = vcmask 7168
        %v418 = vsel %vm417, %v391, %v397
        %v419 = vsel %vm417, %v394, %v400
        %vm420 = vcmask 15360
        %v421 = vsel %vm420, %v418, %v403
        %v422 = vsel %vm420, %v419, %v406
        %vm423 = vcmask 23552
        %v424 = vsel %vm423, %v421, %v413
        %v425 = vsel %vm423, %v422, %v416
        %v426 = vrcp.pop 256.0
        %v427 = vmul.f32 %v424, %v426
        %v428 = vmul.f32 %v425, %v426
        %v429 = vmul.f32 %v424, %v427
        %v430 = vmul.f32 %v425, %v428
        %433 = vrot.lane.b32.xlu0 %v429, 2
        %v434 = vpop.permute.xlu0 %433
        %435 = vrot.lane.b32.xlu0 %v430, 2
        %v436 = vpop.permute.xlu0 %435
        %v439 = vsub.f32 %v424, %v434
        %v440 = vsub.f32 %v425, %v436
        %v441 = vrcp.pop 255.0
        %v442 = vmul.f32 %v439, %v441
        %v443 = vmul.f32 %v440, %v441
        %v444 = vadd.f32 %v442, 1e-06
        %v445 = vadd.f32 %v443, 1e-06
        %v446 = vrsqrt.pop %v444
        %v447 = vrsqrt.pop %v445
        %v448 = vsub.f32 256.0, %v380
        %v449 = vadd.f32 %v448, 1e-06
        %v450 = vlaneseq
        %v451 = vshrl.u32 %v450, 7
        %v452 = vsub.s32 0, %v451
        %v453 = vrot.slane %v449, %v452
        %v454 = vrcp.pop %v453
        %v455 = vmul.f32 %v424, %v454
        %v456 = vmul.f32 %v425, %v454
        %v457 = vlaneseq
        %v458 = vshrl.u32 %v457, 7
        %v459 = vsub.s32 0, %v458
        %v460 = vrot.slane %v380, %v459
        %v461 = vmul.f32 %v460, %v455
        %v462 = vmul.f32 %v460, %v456
        %v463 = vadd.f32 %v424, %v461
        %v464 = vadd.f32 %v425, %v462
        %v465 = vmul.f32 %v463, %v426
        %v466 = vmul.f32 %v464, %v426
        %v467 = vmul.f32 %v465, 2.0
        %v468 = vmul.f32 %v466, 2.0
        %v469 = vmul.f32 %v467, %v424
        %v470 = vmul.f32 %v468, %v425
        %473 = vrot.lane.b32.xlu0 %v469, 2
        %v474 = vpop.permute.xlu0 %473
        %475 = vrot.lane.b32.xlu0 %v470, 2
        %v476 = vpop.permute.xlu0 %475
        %v479 = vsub.f32 %v424, %v474
        %v480 = vsub.f32 %v425, %v476
        %v481 = vmul.f32 %v465, %v465
        %v482 = vmul.f32 %v466, %v466
        %v483 = vlaneseq
        %v484 = vshrl.u32 %v483, 7
        %v485 = vsub.s32 0, %v484
        %v486 = vrot.slane %v448, %v485
        %v487 = vmul.f32 %v481, %v486
        %v488 = vmul.f32 %v482, %v486
        %491 = vrot.lane.b32.xlu0 %v487, 2
        %v492 = vpop.permute.xlu0 %491
        %493 = vrot.lane.b32.xlu0 %v488, 2
        %v494 = vpop.permute.xlu0 %493
        %v497 = vadd.f32 %v479, %v492
        %v498 = vadd.f32 %v480, %v494
        %v499 = vsub.f32 %v455, %v465
        %v500 = vsub.f32 %v456, %v466
        %v501 = vmul.f32 %v499, %v499
        %v502 = vmul.f32 %v500, %v500
        %v503 = vmul.f32 %v460, %v501
        %v504 = vmul.f32 %v460, %v502
        %507 = vrot.lane.b32.xlu0 %v503, 2
        %v508 = vpop.permute.xlu0 %507
        %509 = vrot.lane.b32.xlu0 %v504, 2
        %v510 = vpop.permute.xlu0 %509
        %v513 = vadd.f32 %v497, %v508
        %v514 = vadd.f32 %v498, %v510
        %v515 = vsub.f32 %v448, 1.0
        %v516 = vadd.f32 %v515, 1e-06
        %v517 = vlaneseq
        %v518 = vshrl.u32 %v517, 7
        %v519 = vsub.s32 0, %v518
        %v520 = vrot.slane %v516, %v519
        %v521 = vrcp.pop %v520
        %v522 = vmul.f32 %v513, %v521
        %v523 = vmul.f32 %v514, %v521
        %v524 = vadd.f32 %v522, 1e-06
        %v525 = vadd.f32 %v523, 1e-06
        %v526 = vrsqrt.pop %v524
        %v527 = vrsqrt.pop %v525
        %530 = vrot.lane.b32.xlu0 %v446, 127
        %v531 = vpop.permute.xlu0 %530
        %532 = vrot.lane.b32.xlu0 %v447, 127
        %v533 = vpop.permute.xlu0 %532
        %538 = vrot.lane.b32.xlu0 %v455, 1
        %v539 = vpop.permute.xlu0 %538
        %540 = vrot.lane.b32.xlu0 %v456, 1
        %v541 = vpop.permute.xlu0 %540
        %v544 = vsel %vm417, %v427, %v531
        %v545 = vsel %vm417, %v428, %v533
        %v546 = vsel %vm420, %v544, %v539
        %v547 = vsel %vm420, %v545, %v541
        %v548 = vsel %vm423, %v546, %v526
        %v549 = vsel %vm423, %v547, %v527
        %552 = vrot.lane.b32.xlu0 %v548, 127
        %v553 = vpop.permute.xlu0 %552
        %554 = vrot.lane.b32.xlu0 %v549, 127
        %v555 = vpop.permute.xlu0 %554
        %v558 = vmul.f32 %v359, %v553
        %v559 = vmul.f32 %v360, %v555
        %v560 = vmul.f32 %v558, %v548
        %v561 = vmul.f32 %v559, %v549
        %v562 = vsub.f32 %v361, %v560
        %v563 = vsub.f32 %v362, %v561
        %564 = vrot.lane.b32.xlu0 %v548, 125
        %v565 = vpop.permute.xlu0 %564
        %566 = vrot.lane.b32.xlu0 %v549, 125
        %v567 = vpop.permute.xlu0 %566
        %v570 = vmul.f32 %v359, %v565
        %v571 = vmul.f32 %v360, %v567
        %572 = vrot.lane.b32.xlu0 %v548, 126
        %v573 = vpop.permute.xlu0 %572
        %574 = vrot.lane.b32.xlu0 %v549, 126
        %v575 = vpop.permute.xlu0 %574
        %v578 = vmul.f32 %v570, %v573
        %v579 = vmul.f32 %v571, %v575
        %v580 = vsub.f32 %v361, %v578
        %v581 = vsub.f32 %v362, %v579
        %vm582 = vcmp.gt.f32.partialorder %v358, 0.0
        %v583 = vsel %vm582, 1, 0
        %v584 = vlaneseq
        %v585 = vshrl.u32 %v584, 7
        %v586 = vsub.s32 0, %v585
        %v587 = vrot.slane %v583, %v586
        %v588 = vlaneseq
        %v589 = vshrl.u32 %v588, 7
        %v590 = vsub.s32 1, %v589
        %v591 = vrot.slane %v583, %v590
        %vm592 = vcmp.eq.s32.totalorder %v587, 1
        %vm593 = vcmp.eq.s32.totalorder %v591, 1
        %595 = vset.pattern.permute.xlu0 0
        %596 = vperm.xlu0 %595, %v570
        %v597 = vpop.permute.xlu0 %596
        %600 = vset.pattern.permute.xlu0 0
        %601 = vperm.xlu0 %600, %v571
        %v602 = vpop.permute.xlu0 %601
        %605 = vset.pattern.permute.xlu0 0
        %606 = vperm.xlu0 %605, %v558
        %v607 = vpop.permute.xlu0 %606
        %610 = vset.pattern.permute.xlu0 0
        %611 = vperm.xlu0 %610, %v559
        %v612 = vpop.permute.xlu0 %611
        %v614 = vsel %vm592, %v597, %v607
        %v615 = vsel %vm593, %v597, %v607
        %v616 = vsel %vm592, %v602, %v612
        %v617 = vsel %vm593, %v602, %v612
        %619 = vset.pattern.permute.xlu0 0
        %620 = vperm.xlu0 %619, %v580
        %v621 = vpop.permute.xlu0 %620
        %624 = vset.pattern.permute.xlu0 0
        %625 = vperm.xlu0 %624, %v581
        %v626 = vpop.permute.xlu0 %625
        %629 = vset.pattern.permute.xlu0 0
        %630 = vperm.xlu0 %629, %v562
        %v631 = vpop.permute.xlu0 %630
        %634 = vset.pattern.permute.xlu0 0
        %635 = vperm.xlu0 %634, %v563
        %v636 = vpop.permute.xlu0 %635
        %v638 = vsel %vm592, %v621, %v631
        %v639 = vsel %vm593, %v621, %v631
        %v640 = vsel %vm592, %v626, %v636
        %v641 = vsel %vm593, %v626, %v636
        %v642 = vmul.f32 %v354, %v614
        %v643 = vmul.f32 %v355, %v615
        %v644 = vmul.f32 %v356, %v616
        %v645 = vmul.f32 %v357, %v617
        %v646 = vadd.f32 %v642, %v638
        %v647 = vadd.f32 %v643, %v639
        %v648 = vadd.f32 %v644, %v640
        %v649 = vadd.f32 %v645, %v641
        %650 = vst [vmem:[%s349] sm:$0xff] %v646
        %651 = vst [vmem:[%s349 + $0x8] sm:$0xff] %v647
        %652 = vst [vmem:[%s349 + $0x10] sm:$0xff] %v648
        %653 = vst [vmem:[%s349 + $0x18] sm:$0xff] %v649
        %s654 = sand.u32 %s155, 1
        %s655 = scalar_lea.sflag [#allocation4], %s654
        %s656 = sand.u32 %s155, 1
        %s657 = smul.addr %s656, 32
        %s658 = scalar_lea.vmem [#allocation10], %s657
        // Predicated region
        $region53: #{tpu_custom_call.1} parent=35 // pred_check
          %p659 = pneg %p165
        $region54: #{tpu_custom_call.1} parent=35 // pred_check_branch
          %661 = sbr.rel (%p659) target = $region56
        $region55: #{tpu_custom_call.1} parent=35 // pred_region
          %s662 = smul.u32 2, %s32
          %s664 = ssub.s32 512, 512
          %665 = vsyncadd %s655, %s664
          %s666 = smul.addr %s662, 2
          %s667 = smul.addr %s31, 8
          %s668 = sadd.s32 %s666, %s667
          %s669 = smul.addr %s668, 128
          %s670 = scalar_lea.hbm %s4, %s669
          %s671 = sshll.u32 %s658, 4
          %s672 = int_to_ptr.vmem [resolvable:$true] %s671
          %677 = dma.vmem_to_hbm [thread:$0]  %s672, 512, %s670, %s655, 256, 256, 16
        $region56: #{tpu_custom_call.1} parent=35 // pred_fallthru
          _
      $region36: #{tpu_custom_call.1} parent=5 // pred_fallthru
        _
      %p678 = scmp.le.s32.totalorder 2, %s22
      // Predicated region
      $region57: #{tpu_custom_call.1} parent=5 // pred_check
        %p679 = pneg %p678
      $region58: #{tpu_custom_call.1} parent=5 // pred_check_branch
        %681 = sbr.rel (%p679) target = $region60
      $region59: #{tpu_custom_call.1} parent=5 // pred_region
        %s682 = ssub.s32 %s22, 2
        // Predicated region
        $region61: #{tpu_custom_call.1} parent=59 // pred_check
          %p683 = pneg %p171
        $region62: #{tpu_custom_call.1} parent=59 // pred_check_branch
          %685 = sbr.rel (%p683) target = $region64
        $region63: #{tpu_custom_call.1} parent=59 // pred_region
          %s686 = sand.u32 %s156, 1
          %s687 = scalar_lea.sflag [#allocation4], %s686
          %s688 = sand.u32 %s156, 1
          %s689 = smul.addr %s688, 32
          %s690 = scalar_lea.vmem [#allocation10], %s689
          %691 = dma.done %s687, 512
        $region64: #{tpu_custom_call.1} parent=59 // pred_fallthru
          _
      $region60: #{tpu_custom_call.1} parent=5 // pred_fallthru
        _
    $region6: #{tpu_custom_call.1} parent=1 // loop_footer
      %s26 = sadd.s32 1, %s22
    $region7: #{tpu_custom_call.1} parent=1 // loop_footer_branch
      %21 = sbr.rel target = $region3
    $region8: #{tpu_custom_call.1} parent=1 // loop_exit
      _
    %692 = vsyncpa [#allocation3], 1
    %s693 = scalar_lea.sflag [#allocation3], 1
    %694 = vsyncpa %s693, 1
    %695 = vsyncpa [#allocation6], 1
    %s696 = scalar_lea.sflag [#allocation6], 1
    %697 = vsyncpa %s696, 1
    %698 = vsyncpa [#allocation9], 1
    %s699 = scalar_lea.sflag [#allocation9], 1
    %700 = vsyncpa %s699, 1
    %701 = vsyncpa [#allocation4], 1
    %s702 = scalar_lea.sflag [#allocation4], 1
    %703 = vsyncpa %s702, 1

</llo_original>
